<compile_context>
chip_gen: v7x
topology: tpu7x:2x2x1
jax: 0.10.0
libtpu: 0.0.40
codegen_flags: <defaults>
</compile_context>

<pallas_src>
import functools
import math

import jax
import jax.numpy as jnp
import numpy as np
from jax.experimental import pallas as pl
from jax.experimental.pallas import tpu as pltpu


# ----------------------------------------------------------------------------- kernels
def _down_kernel(x_ref, p_ref, o_ref, *, precision):
    """IF_node=False: o = down_sampling(x) as one compact (L, L) selector matmul."""
    o_ref[...] = jnp.dot(x_ref[...], p_ref[...],
                         preferred_element_type=jnp.float32,
                         precision=precision).astype(o_ref.dtype)


def _node_aligned_kernel(x_ref, p_ref, e1_ref, e2_ref, o1_ref, o2_ref, *,
                         num_samp, seg, precision):
    """IF_node=True, seg % 128 == 0 (lane-aligned fast path).

    x_ref : (TR, L)   TR = TB * num_id flattened input rows
    p_ref : (L, L)    compact down-sampling permutation (0/1, one 1 per column)
    e*_ref: (TR, L)   node-emb already in down-sampled (e1) / interval (e2) order
    o*_ref: (TR, 2L)  flattened outputs; column block i (width 2*seg) holds
                      [x-derived seg | node-emb seg]
    All column offsets/widths are multiples of seg (a multiple of 128) -> unmasked
    stores; x_2 needs no matmul at all.
    """
    x = x_ref[...]
    dx = jnp.dot(x, p_ref[...], preferred_element_type=jnp.float32,
                 precision=precision).astype(o1_ref.dtype)
    C = 2 * seg
    for i in range(num_samp):                       # static, small trip count
        lo, hi = i * seg, (i + 1) * seg
        o1_ref[:, i * C:i * C + seg] = dx[:, lo:hi]
        o1_ref[:, i * C + seg:(i + 1) * C] = e1_ref[:, lo:hi]
        o2_ref[:, i * C:i * C + seg] = x[:, lo:hi]
        o2_ref[:, i * C + seg:(i + 1) * C] = e2_ref[:, lo:hi]


def _node_wide_kernel(x_ref, p1_ref, p2_ref, e1_ref, e2_ref, o1_ref, o2_ref, *,
                      precision):
    """IF_node=True, seg % 128 != 0 fallback: full-width selector matmuls keep every
    store a single unmasked (TR, 2L) slab.  Selector columns corresponding to node-emb
    are zero; e*_ref carries the emb values there."""
    x = x_ref[...]
    o1 = jnp.dot(x, p1_ref[...], preferred_element_type=jnp.float32, precision=precision)
    o2 = jnp.dot(x, p2_ref[...], preferred_element_type=jnp.float32, precision=precision)
    o1_ref[...] = (o1 + e1_ref[...]).astype(o1_ref.dtype)
    o2_ref[...] = (o2 + e2_ref[...]).astype(o2_ref.dtype)


# --------------------------------------------------------------------------- constants
def _sel_down_compact(L, num_samp, dtype):
    """(L, L) 0/1 matrix: (x_row @ P)[i*seg + j] = x_row[j*num_samp + i]."""
    seg = L // num_samp
    p = np.zeros((L, L), np.float32)
    for i in range(num_samp):
        for j in range(seg):
            p[j * num_samp + i, i * seg + j] = 1.0
    return jnp.asarray(p, dtype=dtype)


def _sel_wide(L, num_samp, dtype):
    """(L, 2L) 0/1 matrices placing down-sampled / interval-sampled x into the
    interleaved output layout; the node-emb columns are left zero."""
    seg = L // num_samp
    C = 2 * seg
    cout = num_samp * C
    p1 = np.zeros((L, cout), np.float32)
    p2 = np.zeros((L, cout), np.float32)
    for i in range(num_samp):
        for j in range(seg):
            p1[j * num_samp + i, i * C + j] = 1.0
            p2[i * seg + j, i * C + j] = 1.0
    return jnp.asarray(p1, dtype=dtype), jnp.asarray(p2, dtype=dtype)


def _emb_slabs_aligned(node_emb, num_samp, tb, dtype):
    """(tb*num_id, L) node-emb slabs in down-sampled (e1) / interval (e2) order."""
    N, L = node_emb.shape
    seg = L // num_samp
    e1 = jnp.transpose(node_emb.reshape(N, seg, num_samp), (0, 2, 1)).reshape(N, L)
    e2 = node_emb
    return (jnp.tile(e1, (tb, 1)).astype(dtype),
            jnp.tile(e2, (tb, 1)).astype(dtype))


def _emb_slabs_wide(node_emb, num_samp, tb, dtype):
    """(tb*num_id, 2L) slabs: zeros in the x-derived columns, emb values elsewhere."""
    N, L = node_emb.shape
    seg = L // num_samp
    cout = 2 * L
    e_int = node_emb.reshape(N, num_samp, seg)
    e_down = jnp.transpose(node_emb.reshape(N, seg, num_samp), (0, 2, 1))
    z = jnp.zeros((N, num_samp, seg), node_emb.dtype)
    e1 = jnp.concatenate([z, e_down], axis=-1).reshape(N, cout)
    e2 = jnp.concatenate([z, e_int], axis=-1).reshape(N, cout)
    return (jnp.tile(e1, (tb, 1)).astype(dtype),
            jnp.tile(e2, (tb, 1)).astype(dtype))


# -------------------------------------------------------------------------- planning
def _vmem_capacity_bytes():
    """Physical VMEM per core; conservative 64 MiB (v7x-sized) fallback."""
    try:
        info = pltpu.get_tpu_info()
        for name in ("vmem_capacity_bytes", "vmem_size_bytes", "vmem_bytes"):
            v = getattr(info, name, None)
            if isinstance(v, (int, np.integer)) and v > 0:
                return int(v)
    except Exception:
        pass
    return 64 << 20


@functools.lru_cache(maxsize=None)
def _high_precision_supported():
    """Probe whether the Mosaic dot lowering accepts Precision.HIGH (3-pass bf16).
    HIGH is bit-exact for our one-hot selectors and halves MXU passes vs HIGHEST;
    fall back to HIGHEST (also exact) if this build rejects it."""
    def _probe(a_ref, b_ref, o_ref):
        o_ref[...] = jnp.dot(a_ref[...], b_ref[...],
                             preferred_element_type=jnp.float32,
                             precision=jax.lax.Precision.HIGH)
    try:
        with jax.ensure_compile_time_eval():
            a = jnp.ones((8, 128), jnp.float32)
            b = jnp.ones((128, 128), jnp.float32)
            out = pl.pallas_call(
                _probe, out_shape=jax.ShapeDtypeStruct((8, 128), jnp.float32))(a, b)
            jax.block_until_ready(out)
        return True
    except Exception:
        return False


def _dot_precision(dtype):
    if jnp.dtype(dtype) == jnp.dtype(jnp.float32):
        return (jax.lax.Precision.HIGH if _high_precision_supported()
                else jax.lax.Precision.HIGHEST)
    # bf16 inputs: a single-pass bf16 matmul is already exact for a one-hot selector.
    return jax.lax.Precision.DEFAULT


def _plan_blocks(B, N, L, n_out, cout, n_emb, ecols, p_bytes, itemsize):
    """Pick the per-step batch block `tb`, constant-buffering mode and a VMEM limit.

    Accounting per grid step:
      pipelined (double-buffered): x block (tr, L) + n_out output blocks (tr, cout)
      resident: selector matrices (p_bytes) + n_emb emb slabs (tr, ecols), single-
                buffered once large enough to matter.
    """
    vmem_cap = _vmem_capacity_bytes()
    big_vmem = vmem_cap >= (100 << 20)          # v5e / v6e (128 MiB) vs v7x (64 MiB)
    step_budget = (16 << 20) if big_vmem else (8 << 20)
    cap_limit = (96 << 20) if big_vmem else min(48 << 20, int(vmem_cap * 0.75))

    single_buffer_consts = p_bytes >= (2 << 20)
    buf = 1 if single_buffer_consts else 2

    # dtype-aware sublane granularity: f32 -> 8, bf16 -> 16, int8/fp8 -> 32
    sub = {4: 8, 2: 16, 1: 32}.get(itemsize, 8)
    gran = sub // math.gcd(N, sub)              # smallest tb with (tb*N) % sub == 0

    per_batch = N * (2 * (L + n_out * cout) + buf * n_emb * ecols) * itemsize
    budget = max(step_budget - buf * p_bytes, per_batch)

    if gran > B:
        tb = B                                  # full rows block -> always legal
    else:
        tb = max(1, min(B, budget // max(per_batch, 1)))
        tb = max(gran, (tb // gran) * gran)
        if B // tb < 4:                         # prefer >=4 steps (2 per TC on v7x)
            alt = (B // 4 // gran) * gran
            if alt >= gran:
                tb = min(tb, alt)
        while tb > gran and B % tb != 0:        # exact division: no masked edge blocks
            tb -= gran
        if B % tb != 0:
            tb = B
        if (tb * N) % sub != 0 and tb != B:     # paranoia; by construction never hit
            tb = B

    tr = tb * N
    need = buf * p_bytes + tr * (2 * (L + n_out * cout) + buf * n_emb * ecols) * itemsize
    vmem_limit = 2 * need + (4 << 20)
    vmem_limit = max(vmem_limit, 32 << 20)
    vmem_limit = min(vmem_limit, cap_limit)
    vmem_limit = int(max(vmem_limit, need + (2 << 20)))  # never below the actual need
    return tb, single_buffer_consts, vmem_limit


# ---------------------------------------------------------------------------- forward
def embed_forward(x, node_emb, *, num_samp, if_node, use_pallas=True):
    """x: (B, num_id, Input_len), node_emb: (num_id, Input_len) ->
    (x_1, x_2), each of shape (B, num_id, num_samp, C)."""
    B, N, L = x.shape
    assert L % num_samp == 0, "Input_len must be divisible by num_samp"
    assert node_emb.shape == (N, L)
    seg = L // num_samp

    # TODO(synk): production callers should dispatch tiny shapes (output lane width
    # < 128) to the pure-JAX path; kept on the kernel here so the test exercises it.
    if not use_pallas:
        return _reference_forward(x, node_emb, num_samp=num_samp, if_node=if_node)

    dtype = x.dtype
    itemsize = jnp.dtype(dtype).itemsize
    rows = B * N
    x2d = x.reshape(rows, L)                    # zero-cost leading-dim merge
    precision = _dot_precision(dtype)
    aligned = (seg % 128 == 0)

    def _const_spec(shape, single_buffer):
        # Grid-invariant operand: constant index_map; single-buffer it when large
        # (double-buffering a constant is pure VMEM waste).
        if single_buffer:
            return pl.BlockSpec(shape, lambda g: (0,) * len(shape),
                                pipeline_mode=pl.Buffered(1))
        return pl.BlockSpec(shape, lambda g: (0,) * len(shape))

    # ---------------------------------------------------------------- IF_node = False
    if not if_node:
        cout = L                                # num_samp * seg
        p = _sel_down_compact(L, num_samp, dtype)
        p_bytes = int(p.size) * itemsize
        tb, single_buf, vmem_limit = _plan_blocks(
            B, N, L, n_out=1, cout=cout, n_emb=0, ecols=0,
            p_bytes=p_bytes, itemsize=itemsize)
        tr = tb * N
        o1 = pl.pallas_call(
            functools.partial(_down_kernel, precision=precision),
            grid=(B // tb,),
            in_specs=[pl.BlockSpec((tr, L), lambda g: (g, 0)),
                      _const_spec((L, L), single_buf)],
            out_specs=pl.BlockSpec((tr, cout), lambda g: (g, 0)),
            out_shape=jax.ShapeDtypeStruct((rows, cout), dtype),
            compiler_params=pltpu.CompilerParams(
                dimension_semantics=("parallel",),
                vmem_limit_bytes=vmem_limit),
            cost_estimate=pl.CostEstimate(
                flops=2 * rows * L * L, transcendentals=0,
                bytes_accessed=(rows * L + rows * cout + L * L) * itemsize),
        )(x2d, p)
        x_1 = o1.reshape(B, N, num_samp, seg)
        x_2 = x.reshape(B, N, num_samp, seg)    # Interval_sample == free reshape of x
        return x_1, x_2

    # ----------------------------------------------------------------- IF_node = True
    C = 2 * seg
    cout = num_samp * C                         # == 2 * L
    if aligned:
        p = _sel_down_compact(L, num_samp, dtype)
        p_bytes = int(p.size) * itemsize
        ecols = L
        tb, single_buf, vmem_limit = _plan_blocks(
            B, N, L, n_out=2, cout=cout, n_emb=2, ecols=ecols,
            p_bytes=p_bytes, itemsize=itemsize)
        tr = tb * N
        e1, e2 = _emb_slabs_aligned(node_emb, num_samp, tb, dtype)
        kernel = functools.partial(_node_aligned_kernel,
                                   num_samp=num_samp, seg=seg, precision=precision)
        in_specs = [pl.BlockSpec((tr, L), lambda g: (g, 0)),
                    _const_spec((L, L), single_buf),
                    _const_spec((tr, ecols), single_buf),
                    _const_spec((tr, ecols), single_buf)]
        operands = (x2d, p, e1, e2)
        flops = 2 * rows * L * L
        bytes_accessed = (rows * L + 2 * rows * cout + L * L + 2 * tr * ecols) * itemsize
    else:
        p1, p2 = _sel_wide(L, num_samp, dtype)
        p_bytes = (int(p1.size) + int(p2.size)) * itemsize
        ecols = cout
        tb, single_buf, vmem_limit = _plan_blocks(
            B, N, L, n_out=2, cout=cout, n_emb=2, ecols=ecols,
            p_bytes=p_bytes, itemsize=itemsize)
        tr = tb * N
        e1, e2 = _emb_slabs_wide(node_emb, num_samp, tb, dtype)
        kernel = functools.partial(_node_wide_kernel, precision=precision)
        in_specs = [pl.BlockSpec((tr, L), lambda g: (g, 0)),
                    _const_spec((L, cout), single_buf),
                    _const_spec((L, cout), single_buf),
                    _const_spec((tr, ecols), single_buf),
                    _const_spec((tr, ecols), single_buf)]
        operands = (x2d, p1, p2, e1, e2)
        flops = 2 * 2 * rows * L * cout
        bytes_accessed = (rows * L + 2 * rows * cout + 2 * L * cout
                          + 2 * tr * ecols) * itemsize

    out_sds = jax.ShapeDtypeStruct((rows, cout), dtype)
    o1, o2 = pl.pallas_call(
        kernel,
        grid=(B // tb,),
        in_specs=in_specs,
        out_specs=[pl.BlockSpec((tr, cout), lambda g: (g, 0)),
                   pl.BlockSpec((tr, cout), lambda g: (g, 0))],
        out_shape=(out_sds, out_sds),
        compiler_params=pltpu.CompilerParams(
            dimension_semantics=("parallel",),
            vmem_limit_bytes=vmem_limit),
        cost_estimate=pl.CostEstimate(
            flops=flops, transcendentals=0, bytes_accessed=bytes_accessed),
    )(*operands)

    # Free reshapes back to the PyTorch output layout (B, num_id, num_samp, C).
    x_1 = o1.reshape(B, N, num_samp, C)
    x_2 = o2.reshape(B, N, num_samp, C)
    return x_1, x_2


# --------------------------------------------------------------------------- reference
def _reference_forward(x, node_emb, *, num_samp, if_node):
    """Pure-JAX mirror of the torch forward (for verification)."""
    B, N, L = x.shape
    seg = L // num_samp

    def down(d):      # out[..., i, j] = d[..., j*num_samp + i]
        return jnp.transpose(d.reshape(B, N, seg, num_samp), (0, 1, 3, 2))

    def interval(d):  # out[..., i, j] = d[..., i*seg + j]
        return d.reshape(B, N, num_samp, seg)

    emb_b = jnp.broadcast_to(node_emb[None], (B, N, L))
    x1, x2 = down(x), interval(x)
    if if_node:
        x1 = jnp.concatenate([x1, down(emb_b)], axis=-1)
        x2 = jnp.concatenate([x2, interval(emb_b)], axis=-1)
    return x1, x2


# --------------------------------------------------------------------------------- test
if __name__ == "__main__":
    def _run_case(batch, num_id, Input_len, num_samp, if_node, key):
        k_x, k_emb = jax.random.split(key)
        x = jax.random.normal(k_x, (batch, num_id, Input_len), dtype=jnp.float32)
        # node_emb ~ xavier_uniform_((num_id, Input_len))
        bound = float(np.sqrt(6.0 / (num_id + Input_len)))
        node_emb = jax.random.uniform(k_emb, (num_id, Input_len),
                                      minval=-bound, maxval=bound, dtype=jnp.float32)
        fwd = jax.jit(functools.partial(embed_forward, num_samp=num_samp,
                                        if_node=if_node))
        got = fwd(x, node_emb)
        jax.block_until_ready(got)
        want = _reference_forward(x, node_emb, num_samp=num_samp, if_node=if_node)
        for g, w in zip(got, want):
            assert g.shape == w.shape, (g.shape, w.shape)
            np.testing.assert_allclose(np.asarray(g), np.asarray(w), rtol=0, atol=1e-6)

    key = jax.random.PRNGKey(0)
    k1, k2, k3 = jax.random.split(key, 3)

    # Small shapes matching the module's intent (exercises the unaligned "wide" path).
    _run_case(batch=2, num_id=4, Input_len=16, num_samp=4, if_node=True, key=k1)
    # IF_node=False path (single compact matmul; Interval_sample is a free reshape).
    _run_case(batch=2, num_id=4, Input_len=16, num_samp=4, if_node=False, key=k2)
    # Lane-aligned fast path (seg == 128): compact selector + slab stores, no P2 matmul.
    _run_case(batch=4, num_id=8, Input_len=512, num_samp=4, if_node=True, key=k3)

    print("KERNEL_OK")
</pallas_src>

<mosaic_0001>
module attributes {stable_mosaic.version = 11 : i64} {
  func.func @_node_wide_kernel(%arg0: i32, %arg1: memref<8x16xf32, #tpu.memory_space<vmem>>, %arg2: memref<16x32xf32, #tpu.memory_space<vmem>>, %arg3: memref<16x32xf32, #tpu.memory_space<vmem>>, %arg4: memref<8x32xf32, #tpu.memory_space<vmem>>, %arg5: memref<8x32xf32, #tpu.memory_space<vmem>>, %arg6: memref<8x32xf32, #tpu.memory_space<vmem>>, %arg7: memref<8x32xf32, #tpu.memory_space<vmem>>) attributes {dimension_semantics = [#tpu.dimension_semantics<parallel>], iteration_bounds = array<i64: 1>, scalar_prefetch = 0 : i64, scratch_operands = 0 : i64, tpu.core_type = #tpu.core_type<tc>, window_params = [{transform_indices = @transform_0, window_bounds = array<i64: 8, 16>}, {pipeline_mode = #tpu.pipeline_mode<synchronous>, transform_indices = @transform_1, window_bounds = array<i64: 16, 32>}, {pipeline_mode = #tpu.pipeline_mode<synchronous>, transform_indices = @transform_2, window_bounds = array<i64: 16, 32>}, {pipeline_mode = #tpu.pipeline_mode<synchronous>, transform_indices = @transform_3, window_bounds = array<i64: 8, 32>}, {pipeline_mode = #tpu.pipeline_mode<synchronous>, transform_indices = @transform_4, window_bounds = array<i64: 8, 32>}, {transform_indices = @transform_5, window_bounds = array<i64: 8, 32>}, {transform_indices = @transform_6, window_bounds = array<i64: 8, 32>}]} {
    %c0 = arith.constant 0 : index
    %c0_0 = arith.constant 0 : index
    %0 = vector.load %arg1[%c0, %c0_0] : memref<8x16xf32, #tpu.memory_space<vmem>>, vector<8x16xf32>
    %c0_1 = arith.constant 0 : index
    %c0_2 = arith.constant 0 : index
    %1 = vector.load %arg2[%c0_1, %c0_2] : memref<16x32xf32, #tpu.memory_space<vmem>>, vector<16x32xf32>
    %cst = arith.constant dense<0.000000e+00> : vector<8x32xf32>
    %2 = tpu.matmul %0, %1, %cst {dimension_numbers = #tpu.dot_dimension_numbers<[1], [0], [0], [1], [0, 0, 1, 1], [], []>, precision = #tpu.contract_precision<fp32>} : vector<8x16xf32>, vector<16x32xf32>, vector<8x32xf32> -> vector<8x32xf32>
    %c0_3 = arith.constant 0 : index
    %c0_4 = arith.constant 0 : index
    %3 = vector.load %arg3[%c0_3, %c0_4] : memref<16x32xf32, #tpu.memory_space<vmem>>, vector<16x32xf32>
    %cst_5 = arith.constant dense<0.000000e+00> : vector<8x32xf32>
    %4 = tpu.matmul %0, %3, %cst_5 {dimension_numbers = #tpu.dot_dimension_numbers<[1], [0], [0], [1], [0, 0, 1, 1], [], []>, precision = #tpu.contract_precision<fp32>} : vector<8x16xf32>, vector<16x32xf32>, vector<8x32xf32> -> vector<8x32xf32>
    %c0_6 = arith.constant 0 : index
    %c0_7 = arith.constant 0 : index
    %5 = vector.load %arg4[%c0_6, %c0_7] : memref<8x32xf32, #tpu.memory_space<vmem>>, vector<8x32xf32>
    %6 = arith.addf %2, %5 : vector<8x32xf32>
    %c0_8 = arith.constant 0 : index
    %c0_9 = arith.constant 0 : index
    %7 = vector.load %arg6[%c0_8, %c0_9] : memref<8x32xf32, #tpu.memory_space<vmem>>, vector<8x32xf32>
    tpu.vector_store %arg6[%c0_8, %c0_9], %6 {strides = array<i32>} : memref<8x32xf32, #tpu.memory_space<vmem>>, vector<8x32xf32>,
    %c0_10 = arith.constant 0 : index
    %c0_11 = arith.constant 0 : index
    %8 = vector.load %arg5[%c0_10, %c0_11] : memref<8x32xf32, #tpu.memory_space<vmem>>, vector<8x32xf32>
    %9 = arith.addf %4, %8 : vector<8x32xf32>
    %c0_12 = arith.constant 0 : index
    %c0_13 = arith.constant 0 : index
    %10 = vector.load %arg7[%c0_12, %c0_13] : memref<8x32xf32, #tpu.memory_space<vmem>>, vector<8x32xf32>
    tpu.vector_store %arg7[%c0_12, %c0_13], %9 {strides = array<i32>} : memref<8x32xf32, #tpu.memory_space<vmem>>, vector<8x32xf32>,
    return
  }
  func.func @transform_0(%arg0: i32) -> (i32, i32) {
    %c0_i32 = arith.constant 0 : i32
    %c0_i32_0 = arith.constant 0 : i32
    return %arg0, %c0_i32 : i32, i32
  }
  func.func @transform_1(%arg0: i32) -> (i32, i32) {
    %c0_i32 = arith.constant 0 : i32
    %c0_i32_0 = arith.constant 0 : i32
    %c0_i32_1 = arith.constant 0 : i32
    return %c0_i32, %c0_i32_0 : i32, i32
  }
  func.func @transform_2(%arg0: i32) -> (i32, i32) {
    %c0_i32 = arith.constant 0 : i32
    %c0_i32_0 = arith.constant 0 : i32
    %c0_i32_1 = arith.constant 0 : i32
    return %c0_i32, %c0_i32_0 : i32, i32
  }
  func.func @transform_3(%arg0: i32) -> (i32, i32) {
    %c0_i32 = arith.constant 0 : i32
    %c0_i32_0 = arith.constant 0 : i32
    %c0_i32_1 = arith.constant 0 : i32
    return %c0_i32, %c0_i32_0 : i32, i32
  }
  func.func @transform_4(%arg0: i32) -> (i32, i32) {
    %c0_i32 = arith.constant 0 : i32
    %c0_i32_0 = arith.constant 0 : i32
    %c0_i32_1 = arith.constant 0 : i32
    return %c0_i32, %c0_i32_0 : i32, i32
  }
  func.func @transform_5(%arg0: i32) -> (i32, i32) {
    %c0_i32 = arith.constant 0 : i32
    %c0_i32_0 = arith.constant 0 : i32
    return %arg0, %c0_i32 : i32, i32
  }
  func.func @transform_6(%arg0: i32) -> (i32, i32) {
    %c0_i32 = arith.constant 0 : i32
    %c0_i32_0 = arith.constant 0 : i32
    return %arg0, %c0_i32 : i32, i32
  }
}

</mosaic_0001>

<llo_original>
// kernel: embed_forward.1
$region0: #{embed_forward.1}
  #allocation0 [shape = 'u32[]', space=smem, size = 0x4, offset = 0x4, fixed_abs, tag = 'smem constant byte address 0x4 - core index']
  #allocation1 [shape = 'u32[144,128]{1,0:T(1,128)}', space=vmem, size = 0x12000, scoped, tag = 'internal scratch']
  %s0 = inlined_call_operand.vmem [shape: f32[8,16], index: 0, kind: input, shape index: {}]
  %s1 = inlined_call_operand.vmem [shape: f32[16,32], index: 1, kind: input, shape index: {}]
  %s2 = inlined_call_operand.vmem [shape: f32[16,32], index: 2, kind: input, shape index: {}]
  %s3 = inlined_call_operand.vmem [shape: f32[8,32], index: 3, kind: input, shape index: {}]
  %s4 = inlined_call_operand.vmem [shape: f32[8,32], index: 4, kind: input, shape index: {}]
  %s5 = inlined_call_operand.vmem [shape: f32[8,32], index: 5, kind: output, shape index: {0}]
  %s6 = inlined_call_operand.vmem [shape: f32[8,32], index: 6, kind: output, shape index: {1}]
  %7 = xla_tuple %s5, %s6
  %s8 = sld [smem:[#allocation0]]
  $region38: #{embed_forward.1} parent=0
    _
  %s10 = ssub.s32 1, %s8
  %s11 = scalar_select 0, %s10, %s8
  // Predicated region
  $region2: #{embed_forward.1} parent=0 // pred_check
    _
  $region3: #{embed_forward.1} parent=0 // pred_check_branch
    %13 = sbr.rel (0) target = $region5
  $region4: #{embed_forward.1} parent=0 // pred_region
    _
  $region5: #{embed_forward.1} parent=0 // pred_fallthru
    _
  // Predicated region
  $region6: #{embed_forward.1} parent=0 // pred_check
    _
  $region7: #{embed_forward.1} parent=0 // pred_check_branch
    %15 = sbr.rel (0) target = $region9
  $region8: #{embed_forward.1} parent=0 // pred_region
    _
  $region9: #{embed_forward.1} parent=0 // pred_fallthru
    _
  // Predicated region
  $region10: #{embed_forward.1} parent=0 // pred_check
    _
  $region11: #{embed_forward.1} parent=0 // pred_check_branch
    %17 = sbr.rel (0) target = $region13
  $region12: #{embed_forward.1} parent=0 // pred_region
    _
  $region13: #{embed_forward.1} parent=0 // pred_fallthru
    _
  // Predicated region
  $region14: #{embed_forward.1} parent=0 // pred_check
    _
  $region15: #{embed_forward.1} parent=0 // pred_check_branch
    %19 = sbr.rel (0) target = $region17
  $region16: #{embed_forward.1} parent=0 // pred_region
    _
  $region17: #{embed_forward.1} parent=0 // pred_fallthru
    _
  // Predicated region
  $region18: #{embed_forward.1} parent=0 // pred_check
    _
  $region19: #{embed_forward.1} parent=0 // pred_check_branch
    %21 = sbr.rel (0) target = $region21
  $region20: #{embed_forward.1} parent=0 // pred_region
    _
  $region21: #{embed_forward.1} parent=0 // pred_fallthru
    _
  %v22 = vld [vmem:[%s0] sm:$0xff]
  %v23 = vld [vmem:[%s1] sm:$0xff]
  %v24 = vld [vmem:[%s1 + $0x8] sm:$0xff]
  %v25 = vld [vmem:[%s2] sm:$0xff]
  %v26 = vld [vmem:[%s2 + $0x8] sm:$0xff]
  %v27 = vld [vmem:[%s3] sm:$0xff]
  %vm28 = vcmask 130048
  %v30 = vsel %vm28, %v22, 0
  %32 = vmatprep.subr.mxu0 0.0
  %v33 = vand.u32 %v23, 4294901760
  %34 = vmatpush1.msra.mxu0 %v33
  %35 = vmatprep.subr.mxu0 0.0
  %v36 = vand.u32 %v24, 4294901760
  %37 = vmatpush1.msra.mxu0 %v36
  %38 = vmatprep.subr.mxu0 0.0
  %39 = vmatpush1.msra.mxu0 0.0
  %40 = vmatprep.subr.mxu0 0.0
  %41 = vmatpush1.msra.mxu0 0.0
  %42 = vmatprep.subr.mxu0 0.0
  %43 = vmatpush1.msra.mxu0 0.0
  %44 = vmatprep.subr.mxu0 0.0
  %45 = vmatpush1.msra.mxu0 0.0
  %46 = vmatprep.subr.mxu0 0.0
  %47 = vmatpush1.msra.mxu0 0.0
  %48 = vmatprep.subr.mxu0 0.0
  %49 = vmatpush1.msra.mxu0 0.0
  %50 = vmatprep.subr.mxu0 0.0
  %51 = vmatpush1.msra.mxu0 0.0
  %52 = vmatprep.subr.mxu0 0.0
  %53 = vmatpush1.msra.mxu0 0.0
  %54 = vmatprep.subr.mxu0 0.0
  %55 = vmatpush1.msra.mxu0 0.0
  %56 = vmatprep.subr.mxu0 0.0
  %57 = vmatpush1.msra.mxu0 0.0
  %58 = vmatprep.subr.mxu0 0.0
  %59 = vmatpush1.msra.mxu0 0.0
  %60 = vmatprep.subr.mxu0 0.0
  %61 = vmatpush1.msra.mxu0 0.0
  %62 = vmatprep.subr.mxu0 0.0
  %63 = vmatpush1.msra.mxu0 0.0
  %64 = vmatprep.subr.mxu0 0.0
  %65 = vmatpush1.msra.mxu0 0.0
  %66 = vmatprep.subr.mxu0 0.0
  %67 = vmatpush1.msra.mxu0 0.0
  %68 = vmatprep.subr.mxu0 0.0
  %69 = vmatpush1.msra.mxu0 0.0
  %70 = vmatprep.subr.mxu0 0.0
  %71 = vmatpush1.msra.mxu0 0.0
  %72 = vmatprep.subr.mxu0 0.0
  %73 = vmatpush1.msra.mxu0 0.0
  %74 = vmatprep.subr.mxu0 0.0
  %75 = vmatpush1.msra.mxu0 0.0
  %76 = vmatprep.subr.mxu0 0.0
  %77 = vmatpush1.msra.mxu0 0.0
  %78 = vmatprep.subr.mxu0 0.0
  %79 = vmatpush1.msra.mxu0 0.0
  %80 = vmatprep.subr.mxu0 0.0
  %81 = vmatpush1.msra.mxu0 0.0
  %82 = vmatprep.subr.mxu0 0.0
  %83 = vmatpush1.msra.mxu0 0.0
  %84 = vmatprep.subr.mxu0 0.0
  %85 = vmatpush1.msra.mxu0 0.0
  %86 = vmatprep.subr.mxu0 0.0
  %87 = vmatpush1.msra.mxu0 0.0
  %88 = vmatprep.subr.mxu0 0.0
  %89 = vmatpush1.msra.mxu0 0.0
  %90 = vmatprep.subr.mxu0 0.0
  %91 = vmatpush1.msra.mxu0 0.0
  %92 = vmatprep.subr.mxu0 0.0
  %93 = vmatpush1.msra.mxu0 0.0
  %94 = vmatprep.subr.mxu0 0.0
  %95 = vmatpush1.msra.mxu0 0.0
  %96 = vmatprep.subr.mxu0 0.0
  %97 = vmatpush1.msra.mxu0 0.0
  %98 = vmatprep.mubr.f32.mxu0 0.0
  %v99 = vand.u32 %v30, 4294901760
  %v100 = vsub.f32 %v30, %v99
  %v101 = vand.u32 %v100, 4294901760
  %v102 = vsub.f32 %v100, %v101
  %v103 = vand.u32 %v102, 4294901760
  %104 = vmatmul.mubr.f32.gmra.mrb[0].mxu0 %v103
  %v105 = vpop.f32.mrb[0].mxu0
  %v106 = vadd.f32 %v27, %v105
  %v107 = vpop.f32.mrb[0].mxu0
  %108 = vdwg.mxu0
  %109 = vmatprep.subr.mxu0 0.0
  %v110 = vand.u32 %v23, 4294901760
  %v111 = vsub.f32 %v23, %v110
  %v112 = vand.u32 %v111, 4294901760
  %v113 = vsub.f32 %v111, %v112
  %v114 = vand.u32 %v113, 4294901760
  %115 = vmatpush1.msra.mxu0 %v114
  %116 = vmatprep.subr.mxu0 0.0
  %v117 = vand.u32 %v24, 4294901760
  %v118 = vsub.f32 %v24, %v117
  %v119 = vand.u32 %v118, 4294901760
  %v120 = vsub.f32 %v118, %v119
  %v121 = vand.u32 %v120, 4294901760
  %122 = vmatpush1.msra.mxu0 %v121
  %123 = vmatprep.subr.mxu0 0.0
  %124 = vmatpush1.msra.mxu0 0.0
  %125 = vmatprep.subr.mxu0 0.0
  %126 = vmatpush1.msra.mxu0 0.0
  %127 = vmatprep.subr.mxu0 0.0
  %128 = vmatpush1.msra.mxu0 0.0
  %129 = vmatprep.subr.mxu0 0.0
  %130 = vmatpush1.msra.mxu0 0.0
  %131 = vmatprep.subr.mxu0 0.0
  %132 = vmatpush1.msra.mxu0 0.0
  %133 = vmatprep.subr.mxu0 0.0
  %134 = vmatpush1.msra.mxu0 0.0
  %135 = vmatprep.subr.mxu0 0.0
  %136 = vmatpush1.msra.mxu0 0.0
  %137 = vmatprep.subr.mxu0 0.0
  %138 = vmatpush1.msra.mxu0 0.0
  %139 = vmatprep.subr.mxu0 0.0
  %140 = vmatpush1.msra.mxu0 0.0
  %141 = vmatprep.subr.mxu0 0.0
  %142 = vmatpush1.msra.mxu0 0.0
  %143 = vmatprep.subr.mxu0 0.0
  %144 = vmatpush1.msra.mxu0 0.0
  %145 = vmatprep.subr.mxu0 0.0
  %146 = vmatpush1.msra.mxu0 0.0
  %147 = vmatprep.subr.mxu0 0.0
  %148 = vmatpush1.msra.mxu0 0.0
  %149 = vmatprep.subr.mxu0 0.0
  %150 = vmatpush1.msra.mxu0 0.0
  %151 = vmatprep.subr.mxu0 0.0
  %152 = vmatpush1.msra.mxu0 0.0
  %153 = vmatprep.subr.mxu0 0.0
  %154 = vmatpush1.msra.mxu0 0.0
  %155 = vmatprep.subr.mxu0 0.0
  %156 = vmatpush1.msra.mxu0 0.0
  %157 = vmatprep.subr.mxu0 0.0
  %158 = vmatpush1.msra.mxu0 0.0
  %159 = vmatprep.subr.mxu0 0.0
  %160 = vmatpush1.msra.mxu0 0.0
  %161 = vmatprep.subr.mxu0 0.0
  %162 = vmatpush1.msra.mxu0 0.0
  %163 = vmatprep.subr.mxu0 0.0
  %164 = vmatpush1.msra.mxu0 0.0
  %165 = vmatprep.subr.mxu0 0.0
  %166 = vmatpush1.msra.mxu0 0.0
  %167 = vmatprep.subr.mxu0 0.0
  %168 = vmatpush1.msra.mxu0 0.0
  %169 = vmatprep.subr.mxu0 0.0
  %170 = vmatpush1.msra.mxu0 0.0
  %171 = vmatprep.subr.mxu0 0.0
  %172 = vmatpush1.msra.mxu0 0.0
  %173 = vmatprep.subr.mxu0 0.0
  %174 = vmatpush1.msra.mxu0 0.0
  %175 = vmatprep.subr.mxu0 0.0
  %176 = vmatpush1.msra.mxu0 0.0
  %177 = vmatprep.subr.mxu0 0.0
  %178 = vmatpush1.msra.mxu0 0.0
  %179 = vmatprep.subr.mxu0 0.0
  %180 = vmatpush1.msra.mxu0 0.0
  %181 = vmatprep.subr.mxu0 0.0
  %182 = vmatpush1.msra.mxu0 0.0
  %183 = vmatprep.mubr.f32.mxu0 0.0
  %v184 = vand.u32 %v30, 4294901760
  %185 = vmatmul.mubr.f32.gmra.mrb[0].mxu0 %v184
  %v186 = vpop.f32.mrb[0].mxu0
  %v187 = vadd.f32 %v106, %v186
  %v188 = vpop.f32.mrb[0].mxu0
  %189 = vdwg.mxu0
  %190 = vmatprep.subr.mxu0 0.0
  %v191 = vand.u32 %v23, 4294901760
  %v192 = vsub.f32 %v23, %v191
  %193 = vmatpush1.msra.mxu0 %v192
  %194 = vmatprep.subr.mxu0 0.0
  %v195 = vand.u32 %v24, 4294901760
  %v196 = vsub.f32 %v24, %v195
  %197 = vmatpush1.msra.mxu0 %v196
  %198 = vmatprep.subr.mxu0 0.0
  %199 = vmatpush1.msra.mxu0 0.0
  %200 = vmatprep.subr.mxu0 0.0
  %201 = vmatpush1.msra.mxu0 0.0
  %202 = vmatprep.subr.mxu0 0.0
  %203 = vmatpush1.msra.mxu0 0.0
  %204 = vmatprep.subr.mxu0 0.0
  %205 = vmatpush1.msra.mxu0 0.0
  %206 = vmatprep.subr.mxu0 0.0
  %207 = vmatpush1.msra.mxu0 0.0
  %208 = vmatprep.subr.mxu0 0.0
  %209 = vmatpush1.msra.mxu0 0.0
  %210 = vmatprep.subr.mxu0 0.0
  %211 = vmatpush1.msra.mxu0 0.0
  %212 = vmatprep.subr.mxu0 0.0
  %213 = vmatpush1.msra.mxu0 0.0
  %214 = vmatprep.subr.mxu0 0.0
  %215 = vmatpush1.msra.mxu0 0.0
  %216 = vmatprep.subr.mxu0 0.0
  %217 = vmatpush1.msra.mxu0 0.0
  %218 = vmatprep.subr.mxu0 0.0
  %219 = vmatpush1.msra.mxu0 0.0
  %220 = vmatprep.subr.mxu0 0.0
  %221 = vmatpush1.msra.mxu0 0.0
  %222 = vmatprep.subr.mxu0 0.0
  %223 = vmatpush1.msra.mxu0 0.0
  %224 = vmatprep.subr.mxu0 0.0
  %225 = vmatpush1.msra.mxu0 0.0
  %226 = vmatprep.subr.mxu0 0.0
  %227 = vmatpush1.msra.mxu0 0.0
  %228 = vmatprep.subr.mxu0 0.0
  %229 = vmatpush1.msra.mxu0 0.0
  %230 = vmatprep.subr.mxu0 0.0
  %231 = vmatpush1.msra.mxu0 0.0
  %232 = vmatprep.subr.mxu0 0.0
  %233 = vmatpush1.msra.mxu0 0.0
  %234 = vmatprep.subr.mxu0 0.0
  %235 = vmatpush1.msra.mxu0 0.0
  %236 = vmatprep.subr.mxu0 0.0
  %237 = vmatpush1.msra.mxu0 0.0
  %238 = vmatprep.subr.mxu0 0.0
  %239 = vmatpush1.msra.mxu0 0.0
  %240 = vmatprep.subr.mxu0 0.0
  %241 = vmatpush1.msra.mxu0 0.0
  %242 = vmatprep.subr.mxu0 0.0
  %243 = vmatpush1.msra.mxu0 0.0
  %244 = vmatprep.subr.mxu0 0.0
  %245 = vmatpush1.msra.mxu0 0.0
  %246 = vmatprep.subr.mxu0 0.0
  %247 = vmatpush1.msra.mxu0 0.0
  %248 = vmatprep.subr.mxu0 0.0
  %249 = vmatpush1.msra.mxu0 0.0
  %250 = vmatprep.subr.mxu0 0.0
  %251 = vmatpush1.msra.mxu0 0.0
  %252 = vmatprep.subr.mxu0 0.0
  %253 = vmatpush1.msra.mxu0 0.0
  %254 = vmatprep.subr.mxu0 0.0
  %255 = vmatpush1.msra.mxu0 0.0
  %256 = vmatprep.subr.mxu0 0.0
  %257 = vmatpush1.msra.mxu0 0.0
  %258 = vmatprep.mubr.f32.mxu0 0.0
  %v259 = vand.u32 %v30, 4294901760
  %v260 = vsub.f32 %v30, %v259
  %261 = vmatmul.mubr.f32.gmra.mrb[0].mxu0 %v260
  %v262 = vpop.f32.mrb[0].mxu0
  %v263 = vadd.f32 %v187, %v262
  %v264 = vpop.f32.mrb[0].mxu0
  %265 = vdwg.mxu0
  %266 = vmatprep.subr.mxu0 0.0
  %v267 = vand.u32 %v23, 4294901760
  %268 = vmatpush1.msra.mxu0 %v267
  %269 = vmatprep.subr.mxu0 0.0
  %v270 = vand.u32 %v24, 4294901760
  %271 = vmatpush1.msra.mxu0 %v270
  %272 = vmatprep.subr.mxu0 0.0
  %273 = vmatpush1.msra.mxu0 0.0
  %274 = vmatprep.subr.mxu0 0.0
  %275 = vmatpush1.msra.mxu0 0.0
  %276 = vmatprep.subr.mxu0 0.0
  %277 = vmatpush1.msra.mxu0 0.0
  %278 = vmatprep.subr.mxu0 0.0
  %279 = vmatpush1.msra.mxu0 0.0
  %280 = vmatprep.subr.mxu0 0.0
  %281 = vmatpush1.msra.mxu0 0.0
  %282 = vmatprep.subr.mxu0 0.0
  %283 = vmatpush1.msra.mxu0 0.0
  %284 = vmatprep.subr.mxu0 0.0
  %285 = vmatpush1.msra.mxu0 0.0
  %286 = vmatprep.subr.mxu0 0.0
  %287 = vmatpush1.msra.mxu0 0.0
  %288 = vmatprep.subr.mxu0 0.0
  %289 = vmatpush1.msra.mxu0 0.0
  %290 = vmatprep.subr.mxu0 0.0
  %291 = vmatpush1.msra.mxu0 0.0
  %292 = vmatprep.subr.mxu0 0.0
  %293 = vmatpush1.msra.mxu0 0.0
  %294 = vmatprep.subr.mxu0 0.0
  %295 = vmatpush1.msra.mxu0 0.0
  %296 = vmatprep.subr.mxu0 0.0
  %297 = vmatpush1.msra.mxu0 0.0
  %298 = vmatprep.subr.mxu0 0.0
  %299 = vmatpush1.msra.mxu0 0.0
  %300 = vmatprep.subr.mxu0 0.0
  %301 = vmatpush1.msra.mxu0 0.0
  %302 = vmatprep.subr.mxu0 0.0
  %303 = vmatpush1.msra.mxu0 0.0
  %304 = vmatprep.subr.mxu0 0.0
  %305 = vmatpush1.msra.mxu0 0.0
  %306 = vmatprep.subr.mxu0 0.0
  %307 = vmatpush1.msra.mxu0 0.0
  %308 = vmatprep.subr.mxu0 0.0
  %309 = vmatpush1.msra.mxu0 0.0
  %310 = vmatprep.subr.mxu0 0.0
  %311 = vmatpush1.msra.mxu0 0.0
  %312 = vmatprep.subr.mxu0 0.0
  %313 = vmatpush1.msra.mxu0 0.0
  %314 = vmatprep.subr.mxu0 0.0
  %315 = vmatpush1.msra.mxu0 0.0
  %316 = vmatprep.subr.mxu0 0.0
  %317 = vmatpush1.msra.mxu0 0.0
  %318 = vmatprep.subr.mxu0 0.0
  %319 = vmatpush1.msra.mxu0 0.0
  %320 = vmatprep.subr.mxu0 0.0
  %321 = vmatpush1.msra.mxu0 0.0
  %322 = vmatprep.subr.mxu0 0.0
  %323 = vmatpush1.msra.mxu0 0.0
  %324 = vmatprep.subr.mxu0 0.0
  %325 = vmatpush1.msra.mxu0 0.0
  %326 = vmatprep.subr.mxu0 0.0
  %327 = vmatpush1.msra.mxu0 0.0
  %328 = vmatprep.subr.mxu0 0.0
  %329 = vmatpush1.msra.mxu0 0.0
  %330 = vmatprep.subr.mxu0 0.0
  %331 = vmatpush1.msra.mxu0 0.0
  %332 = vmatprep.mubr.f32.mxu0 0.0
  %v333 = vand.u32 %v30, 4294901760
  %v334 = vsub.f32 %v30, %v333
  %v335 = vand.u32 %v334, 4294901760
  %336 = vmatmul.mubr.f32.gmra.mrb[0].mxu0 %v335
  %v337 = vpop.f32.mrb[0].mxu0
  %v338 = vadd.f32 %v263, %v337
  %v339 = vpop.f32.mrb[0].mxu0
  %340 = vdwg.mxu0
  %341 = vmatprep.subr.mxu0 0.0
  %v342 = vand.u32 %v23, 4294901760
  %v343 = vsub.f32 %v23, %v342
  %v344 = vand.u32 %v343, 4294901760
  %345 = vmatpush1.msra.mxu0 %v344
  %346 = vmatprep.subr.mxu0 0.0
  %v347 = vand.u32 %v24, 4294901760
  %v348 = vsub.f32 %v24, %v347
  %v349 = vand.u32 %v348, 4294901760
  %350 = vmatpush1.msra.mxu0 %v349
  %351 = vmatprep.subr.mxu0 0.0
  %352 = vmatpush1.msra.mxu0 0.0
  %353 = vmatprep.subr.mxu0 0.0
  %354 = vmatpush1.msra.mxu0 0.0
  %355 = vmatprep.subr.mxu0 0.0
  %356 = vmatpush1.msra.mxu0 0.0
  %357 = vmatprep.subr.mxu0 0.0
  %358 = vmatpush1.msra.mxu0 0.0
  %359 = vmatprep.subr.mxu0 0.0
  %360 = vmatpush1.msra.mxu0 0.0
  %361 = vmatprep.subr.mxu0 0.0
  %362 = vmatpush1.msra.mxu0 0.0
  %363 = vmatprep.subr.mxu0 0.0
  %364 = vmatpush1.msra.mxu0 0.0
  %365 = vmatprep.subr.mxu0 0.0
  %366 = vmatpush1.msra.mxu0 0.0
  %367 = vmatprep.subr.mxu0 0.0
  %368 = vmatpush1.msra.mxu0 0.0
  %369 = vmatprep.subr.mxu0 0.0
  %370 = vmatpush1.msra.mxu0 0.0
  %371 = vmatprep.subr.mxu0 0.0
  %372 = vmatpush1.msra.mxu0 0.0
  %373 = vmatprep.subr.mxu0 0.0
  %374 = vmatpush1.msra.mxu0 0.0
  %375 = vmatprep.subr.mxu0 0.0
  %376 = vmatpush1.msra.mxu0 0.0
  %377 = vmatprep.subr.mxu0 0.0
  %378 = vmatpush1.msra.mxu0 0.0
  %379 = vmatprep.subr.mxu0 0.0
  %380 = vmatpush1.msra.mxu0 0.0
  %381 = vmatprep.subr.mxu0 0.0
  %382 = vmatpush1.msra.mxu0 0.0
  %383 = vmatprep.subr.mxu0 0.0
  %384 = vmatpush1.msra.mxu0 0.0
  %385 = vmatprep.subr.mxu0 0.0
  %386 = vmatpush1.msra.mxu0 0.0
  %387 = vmatprep.subr.mxu0 0.0
  %388 = vmatpush1.msra.mxu0 0.0
  %389 = vmatprep.subr.mxu0 0.0
  %390 = vmatpush1.msra.mxu0 0.0
  %391 = vmatprep.subr.mxu0 0.0
  %392 = vmatpush1.msra.mxu0 0.0
  %393 = vmatprep.subr.mxu0 0.0
  %394 = vmatpush1.msra.mxu0 0.0
  %395 = vmatprep.subr.mxu0 0.0
  %396 = vmatpush1.msra.mxu0 0.0
  %397 = vmatprep.subr.mxu0 0.0
  %398 = vmatpush1.msra.mxu0 0.0
  %399 = vmatprep.subr.mxu0 0.0
  %400 = vmatpush1.msra.mxu0 0.0
  %401 = vmatprep.subr.mxu0 0.0
  %402 = vmatpush1.msra.mxu0 0.0
  %403 = vmatprep.subr.mxu0 0.0
  %404 = vmatpush1.msra.mxu0 0.0
  %405 = vmatprep.subr.mxu0 0.0
  %406 = vmatpush1.msra.mxu0 0.0
  %407 = vmatprep.subr.mxu0 0.0
  %408 = vmatpush1.msra.mxu0 0.0
  %409 = vmatprep.subr.mxu0 0.0
  %410 = vmatpush1.msra.mxu0 0.0
  %411 = vmatprep.mubr.f32.mxu0 0.0
  %v412 = vand.u32 %v30, 4294901760
  %413 = vmatmul.mubr.f32.gmra.mrb[0].mxu0 %v412
  %v414 = vpop.f32.mrb[0].mxu0
  %v415 = vadd.f32 %v338, %v414
  %v416 = vpop.f32.mrb[0].mxu0
  %417 = vdwg.mxu0
  %418 = vmatprep.subr.mxu0 0.0
  %v419 = vand.u32 %v23, 4294901760
  %420 = vmatpush1.msra.mxu0 %v419
  %421 = vmatprep.subr.mxu0 0.0
  %v422 = vand.u32 %v24, 4294901760
  %423 = vmatpush1.msra.mxu0 %v422
  %424 = vmatprep.subr.mxu0 0.0
  %425 = vmatpush1.msra.mxu0 0.0
  %426 = vmatprep.subr.mxu0 0.0
  %427 = vmatpush1.msra.mxu0 0.0
  %428 = vmatprep.subr.mxu0 0.0
  %429 = vmatpush1.msra.mxu0 0.0
  %430 = vmatprep.subr.mxu0 0.0
  %431 = vmatpush1.msra.mxu0 0.0
  %432 = vmatprep.subr.mxu0 0.0
  %433 = vmatpush1.msra.mxu0 0.0
  %434 = vmatprep.subr.mxu0 0.0
  %435 = vmatpush1.msra.mxu0 0.0
  %436 = vmatprep.subr.mxu0 0.0
  %437 = vmatpush1.msra.mxu0 0.0
  %438 = vmatprep.subr.mxu0 0.0
  %439 = vmatpush1.msra.mxu0 0.0
  %440 = vmatprep.subr.mxu0 0.0
  %441 = vmatpush1.msra.mxu0 0.0
  %442 = vmatprep.subr.mxu0 0.0
  %443 = vmatpush1.msra.mxu0 0.0
  %444 = vmatprep.subr.mxu0 0.0
  %445 = vmatpush1.msra.mxu0 0.0
  %446 = vmatprep.subr.mxu0 0.0
  %447 = vmatpush1.msra.mxu0 0.0
  %448 = vmatprep.subr.mxu0 0.0
  %449 = vmatpush1.msra.mxu0 0.0
  %450 = vmatprep.subr.mxu0 0.0
  %451 = vmatpush1.msra.mxu0 0.0
  %452 = vmatprep.subr.mxu0 0.0
  %453 = vmatpush1.msra.mxu0 0.0
  %454 = vmatprep.subr.mxu0 0.0
  %455 = vmatpush1.msra.mxu0 0.0
  %456 = vmatprep.subr.mxu0 0.0
  %457 = vmatpush1.msra.mxu0 0.0
  %458 = vmatprep.subr.mxu0 0.0
  %459 = vmatpush1.msra.mxu0 0.0
  %460 = vmatprep.subr.mxu0 0.0
  %461 = vmatpush1.msra.mxu0 0.0
  %462 = vmatprep.subr.mxu0 0.0
  %463 = vmatpush1.msra.mxu0 0.0
  %464 = vmatprep.subr.mxu0 0.0
  %465 = vmatpush1.msra.mxu0 0.0
  %466 = vmatprep.subr.mxu0 0.0
  %467 = vmatpush1.msra.mxu0 0.0
  %468 = vmatprep.subr.mxu0 0.0
  %469 = vmatpush1.msra.mxu0 0.0
  %470 = vmatprep.subr.mxu0 0.0
  %471 = vmatpush1.msra.mxu0 0.0
  %472 = vmatprep.subr.mxu0 0.0
  %473 = vmatpush1.msra.mxu0 0.0
  %474 = vmatprep.subr.mxu0 0.0
  %475 = vmatpush1.msra.mxu0 0.0
  %476 = vmatprep.subr.mxu0 0.0
  %477 = vmatpush1.msra.mxu0 0.0
  %478 = vmatprep.subr.mxu0 0.0
  %479 = vmatpush1.msra.mxu0 0.0
  %480 = vmatprep.subr.mxu0 0.0
  %481 = vmatpush1.msra.mxu0 0.0
  %482 = vmatprep.subr.mxu0 0.0
  %483 = vmatpush1.msra.mxu0 0.0
  %484 = vmatprep.mubr.f32.mxu0 0.0
  %v485 = vand.u32 %v30, 4294901760
  %486 = vmatmul.mubr.f32.gmra.mrb[0].mxu0 %v485
  %v487 = vpop.f32.mrb[0].mxu0
  %v488 = vadd.f32 %v415, %v487
  %v489 = vpop.f32.mrb[0].mxu0
  %490 = vdwg.mxu0
  %vm491 = vcmask 261120
  %492 = vst.msk [vmem:[%s5] sm:$0xff] %vm491, %v488
  %v493 = vld [vmem:[%s4] sm:$0xff]
  %494 = vmatprep.subr.mxu0 0.0
  %v495 = vand.u32 %v25, 4294901760
  %496 = vmatpush1.msra.mxu0 %v495
  %497 = vmatprep.subr.mxu0 0.0
  %v498 = vand.u32 %v26, 4294901760
  %499 = vmatpush1.msra.mxu0 %v498
  %500 = vmatprep.subr.mxu0 0.0
  %501 = vmatpush1.msra.mxu0 0.0
  %502 = vmatprep.subr.mxu0 0.0
  %503 = vmatpush1.msra.mxu0 0.0
  %504 = vmatprep.subr.mxu0 0.0
  %505 = vmatpush1.msra.mxu0 0.0
  %506 = vmatprep.subr.mxu0 0.0
  %507 = vmatpush1.msra.mxu0 0.0
  %508 = vmatprep.subr.mxu0 0.0
  %509 = vmatpush1.msra.mxu0 0.0
  %510 = vmatprep.subr.mxu0 0.0
  %511 = vmatpush1.msra.mxu0 0.0
  %512 = vmatprep.subr.mxu0 0.0
  %513 = vmatpush1.msra.mxu0 0.0
  %514 = vmatprep.subr.mxu0 0.0
  %515 = vmatpush1.msra.mxu0 0.0
  %516 = vmatprep.subr.mxu0 0.0
  %517 = vmatpush1.msra.mxu0 0.0
  %518 = vmatprep.subr.mxu0 0.0
  %519 = vmatpush1.msra.mxu0 0.0
  %520 = vmatprep.subr.mxu0 0.0
  %521 = vmatpush1.msra.mxu0 0.0
  %522 = vmatprep.subr.mxu0 0.0
  %523 = vmatpush1.msra.mxu0 0.0
  %524 = vmatprep.subr.mxu0 0.0
  %525 = vmatpush1.msra.mxu0 0.0
  %526 = vmatprep.subr.mxu0 0.0
  %527 = vmatpush1.msra.mxu0 0.0
  %528 = vmatprep.subr.mxu0 0.0
  %529 = vmatpush1.msra.mxu0 0.0
  %530 = vmatprep.subr.mxu0 0.0
  %531 = vmatpush1.msra.mxu0 0.0
  %532 = vmatprep.subr.mxu0 0.0
  %533 = vmatpush1.msra.mxu0 0.0
  %534 = vmatprep.subr.mxu0 0.0
  %535 = vmatpush1.msra.mxu0 0.0
  %536 = vmatprep.subr.mxu0 0.0
  %537 = vmatpush1.msra.mxu0 0.0
  %538 = vmatprep.subr.mxu0 0.0
  %539 = vmatpush1.msra.mxu0 0.0
  %540 = vmatprep.subr.mxu0 0.0
  %541 = vmatpush1.msra.mxu0 0.0
  %542 = vmatprep.subr.mxu0 0.0
  %543 = vmatpush1.msra.mxu0 0.0
  %544 = vmatprep.subr.mxu0 0.0
  %545 = vmatpush1.msra.mxu0 0.0
  %546 = vmatprep.subr.mxu0 0.0
  %547 = vmatpush1.msra.mxu0 0.0
  %548 = vmatprep.subr.mxu0 0.0
  %549 = vmatpush1.msra.mxu0 0.0
  %550 = vmatprep.subr.mxu0 0.0
  %551 = vmatpush1.msra.mxu0 0.0
  %552 = vmatprep.subr.mxu0 0.0
  %553 = vmatpush1.msra.mxu0 0.0
  %554 = vmatprep.subr.mxu0 0.0
  %555 = vmatpush1.msra.mxu0 0.0
  %556 = vmatprep.subr.mxu0 0.0
  %557 = vmatpush1.msra.mxu0 0.0
  %558 = vmatprep.subr.mxu0 0.0
  %559 = vmatpush1.msra.mxu0 0.0
  %560 = vmatprep.mubr.f32.mxu0 0.0
  %v561 = vand.u32 %v30, 4294901760
  %v562 = vsub.f32 %v30, %v561
  %v563 = vand.u32 %v562, 4294901760
  %v564 = vsub.f32 %v562, %v563
  %v565 = vand.u32 %v564, 4294901760
  %566 = vmatmul.mubr.f32.gmra.mrb[0].mxu0 %v565
  %v567 = vpop.f32.mrb[0].mxu0
  %v568 = vadd.f32 %v493, %v567
  %v569 = vpop.f32.mrb[0].mxu0
  %570 = vdwg.mxu0
  %571 = vmatprep.subr.mxu0 0.0
  %v572 = vand.u32 %v25, 4294901760
  %v573 = vsub.f32 %v25, %v572
  %v574 = vand.u32 %v573, 4294901760
  %v575 = vsub.f32 %v573, %v574
  %v576 = vand.u32 %v575, 4294901760
  %577 = vmatpush1.msra.mxu0 %v576
  %578 = vmatprep.subr.mxu0 0.0
  %v579 = vand.u32 %v26, 4294901760
  %v580 = vsub.f32 %v26, %v579
  %v581 = vand.u32 %v580, 4294901760
  %v582 = vsub.f32 %v580, %v581
  %v583 = vand.u32 %v582, 4294901760
  %584 = vmatpush1.msra.mxu0 %v583
  %585 = vmatprep.subr.mxu0 0.0
  %586 = vmatpush1.msra.mxu0 0.0
  %587 = vmatprep.subr.mxu0 0.0
  %588 = vmatpush1.msra.mxu0 0.0
  %589 = vmatprep.subr.mxu0 0.0
  %590 = vmatpush1.msra.mxu0 0.0
  %591 = vmatprep.subr.mxu0 0.0
  %592 = vmatpush1.msra.mxu0 0.0
  %593 = vmatprep.subr.mxu0 0.0
  %594 = vmatpush1.msra.mxu0 0.0
  %595 = vmatprep.subr.mxu0 0.0
  %596 = vmatpush1.msra.mxu0 0.0
  %597 = vmatprep.subr.mxu0 0.0
  %598 = vmatpush1.msra.mxu0 0.0
  %599 = vmatprep.subr.mxu0 0.0
  %600 = vmatpush1.msra.mxu0 0.0
  %601 = vmatprep.subr.mxu0 0.0
  %602 = vmatpush1.msra.mxu0 0.0
  %603 = vmatprep.subr.mxu0 0.0
  %604 = vmatpush1.msra.mxu0 0.0
  %605 = vmatprep.subr.mxu0 0.0
  %606 = vmatpush1.msra.mxu0 0.0
  %607 = vmatprep.subr.mxu0 0.0
  %608 = vmatpush1.msra.mxu0 0.0
  %609 = vmatprep.subr.mxu0 0.0
  %610 = vmatpush1.msra.mxu0 0.0
  %611 = vmatprep.subr.mxu0 0.0
  %612 = vmatpush1.msra.mxu0 0.0
  %613 = vmatprep.subr.mxu0 0.0
  %614 = vmatpush1.msra.mxu0 0.0
  %615 = vmatprep.subr.mxu0 0.0
  %616 = vmatpush1.msra.mxu0 0.0
  %617 = vmatprep.subr.mxu0 0.0
  %618 = vmatpush1.msra.mxu0 0.0
  %619 = vmatprep.subr.mxu0 0.0
  %620 = vmatpush1.msra.mxu0 0.0
  %621 = vmatprep.subr.mxu0 0.0
  %622 = vmatpush1.msra.mxu0 0.0
  %623 = vmatprep.subr.mxu0 0.0
  %624 = vmatpush1.msra.mxu0 0.0
  %625 = vmatprep.subr.mxu0 0.0
  %626 = vmatpush1.msra.mxu0 0.0
  %627 = vmatprep.subr.mxu0 0.0
  %628 = vmatpush1.msra.mxu0 0.0
  %629 = vmatprep.subr.mxu0 0.0
  %630 = vmatpush1.msra.mxu0 0.0
  %631 = vmatprep.subr.mxu0 0.0
  %632 = vmatpush1.msra.mxu0 0.0
  %633 = vmatprep.subr.mxu0 0.0
  %634 = vmatpush1.msra.mxu0 0.0
  %635 = vmatprep.subr.mxu0 0.0
  %636 = vmatpush1.msra.mxu0 0.0
  %637 = vmatprep.subr.mxu0 0.0
  %638 = vmatpush1.msra.mxu0 0.0
  %639 = vmatprep.subr.mxu0 0.0
  %640 = vmatpush1.msra.mxu0 0.0
  %641 = vmatprep.subr.mxu0 0.0
  %642 = vmatpush1.msra.mxu0 0.0
  %643 = vmatprep.subr.mxu0 0.0
  %644 = vmatpush1.msra.mxu0 0.0
  %645 = vmatprep.mubr.f32.mxu0 0.0
  %v646 = vand.u32 %v30, 4294901760
  %647 = vmatmul.mubr.f32.gmra.mrb[0].mxu0 %v646
  %v648 = vpop.f32.mrb[0].mxu0
  %v649 = vadd.f32 %v568, %v648
  %v650 = vpop.f32.mrb[0].mxu0
  %651 = vdwg.mxu0
  %652 = vmatprep.subr.mxu0 0.0
  %v653 = vand.u32 %v25, 4294901760
  %v654 = vsub.f32 %v25, %v653
  %655 = vmatpush1.msra.mxu0 %v654
  %656 = vmatprep.subr.mxu0 0.0
  %v657 = vand.u32 %v26, 4294901760
  %v658 = vsub.f32 %v26, %v657
  %659 = vmatpush1.msra.mxu0 %v658
  %660 = vmatprep.subr.mxu0 0.0
  %661 = vmatpush1.msra.mxu0 0.0
  %662 = vmatprep.subr.mxu0 0.0
  %663 = vmatpush1.msra.mxu0 0.0
  %664 = vmatprep.subr.mxu0 0.0
  %665 = vmatpush1.msra.mxu0 0.0
  %666 = vmatprep.subr.mxu0 0.0
  %667 = vmatpush1.msra.mxu0 0.0
  %668 = vmatprep.subr.mxu0 0.0
  %669 = vmatpush1.msra.mxu0 0.0
  %670 = vmatprep.subr.mxu0 0.0
  %671 = vmatpush1.msra.mxu0 0.0
  %672 = vmatprep.subr.mxu0 0.0
  %673 = vmatpush1.msra.mxu0 0.0
  %674 = vmatprep.subr.mxu0 0.0
  %675 = vmatpush1.msra.mxu0 0.0
  %676 = vmatprep.subr.mxu0 0.0
  %677 = vmatpush1.msra.mxu0 0.0
  %678 = vmatprep.subr.mxu0 0.0
  %679 = vmatpush1.msra.mxu0 0.0
  %680 = vmatprep.subr.mxu0 0.0
  %681 = vmatpush1.msra.mxu0 0.0
  %682 = vmatprep.subr.mxu0 0.0
  %683 = vmatpush1.msra.mxu0 0.0
  %684 = vmatprep.subr.mxu0 0.0
  %685 = vmatpush1.msra.mxu0 0.0
  %686 = vmatprep.subr.mxu0 0.0
  %687 = vmatpush1.msra.mxu0 0.0
  %688 = vmatprep.subr.mxu0 0.0
  %689 = vmatpush1.msra.mxu0 0.0
  %690 = vmatprep.subr.mxu0 0.0
  %691 = vmatpush1.msra.mxu0 0.0
  %692 = vmatprep.subr.mxu0 0.0
  %693 = vmatpush1.msra.mxu0 0.0
  %694 = vmatprep.subr.mxu0 0.0
  %695 = vmatpush1.msra.mxu0 0.0
  %696 = vmatprep.subr.mxu0 0.0
  %697 = vmatpush1.msra.mxu0 0.0
  %698 = vmatprep.subr.mxu0 0.0
  %699 = vmatpush1.msra.mxu0 0.0
  %700 = vmatprep.subr.mxu0 0.0
  %701 = vmatpush1.msra.mxu0 0.0
  %702 = vmatprep.subr.mxu0 0.0
  %703 = vmatpush1.msra.mxu0 0.0
  %704 = vmatprep.subr.mxu0 0.0
  %705 = vmatpush1.msra.mxu0 0.0
  %706 = vmatprep.subr.mxu0 0.0
  %707 = vmatpush1.msra.mxu0 0.0
  %708 = vmatprep.subr.mxu0 0.0
  %709 = vmatpush1.msra.mxu0 0.0
  %710 = vmatprep.subr.mxu0 0.0
  %711 = vmatpush1.msra.mxu0 0.0
  %712 = vmatprep.subr.mxu0 0.0
  %713 = vmatpush1.msra.mxu0 0.0
  %714 = vmatprep.subr.mxu0 0.0
  %715 = vmatpush1.msra.mxu0 0.0
  %716 = vmatprep.subr.mxu0 0.0
  %717 = vmatpush1.msra.mxu0 0.0
  %718 = vmatprep.subr.mxu0 0.0
  %719 = vmatpush1.msra.mxu0 0.0
  %720 = vmatprep.mubr.f32.mxu0 0.0
  %v721 = vand.u32 %v30, 4294901760
  %v722 = vsub.f32 %v30, %v721
  %723 = vmatmul.mubr.f32.gmra.mrb[0].mxu0 %v722
  %v724 = vpop.f32.mrb[0].mxu0
  %v725 = vadd.f32 %v649, %v724
  %v726 = vpop.f32.mrb[0].mxu0
  %727 = vdwg.mxu0
  %728 = vmatprep.subr.mxu0 0.0
  %v729 = vand.u32 %v25, 4294901760
  %730 = vmatpush1.msra.mxu0 %v729
  %731 = vmatprep.subr.mxu0 0.0
  %v732 = vand.u32 %v26, 4294901760
  %733 = vmatpush1.msra.mxu0 %v732
  %734 = vmatprep.subr.mxu0 0.0
  %735 = vmatpush1.msra.mxu0 0.0
  %736 = vmatprep.subr.mxu0 0.0
  %737 = vmatpush1.msra.mxu0 0.0
  %738 = vmatprep.subr.mxu0 0.0
  %739 = vmatpush1.msra.mxu0 0.0
  %740 = vmatprep.subr.mxu0 0.0
  %741 = vmatpush1.msra.mxu0 0.0
  %742 = vmatprep.subr.mxu0 0.0
  %743 = vmatpush1.msra.mxu0 0.0
  %744 = vmatprep.subr.mxu0 0.0
  %745 = vmatpush1.msra.mxu0 0.0
  %746 = vmatprep.subr.mxu0 0.0
  %747 = vmatpush1.msra.mxu0 0.0
  %748 = vmatprep.subr.mxu0 0.0
  %749 = vmatpush1.msra.mxu0 0.0
  %750 = vmatprep.subr.mxu0 0.0
  %751 = vmatpush1.msra.mxu0 0.0
  %752 = vmatprep.subr.mxu0 0.0
  %753 = vmatpush1.msra.mxu0 0.0
  %754 = vmatprep.subr.mxu0 0.0
  %755 = vmatpush1.msra.mxu0 0.0
  %756 = vmatprep.subr.mxu0 0.0
  %757 = vmatpush1.msra.mxu0 0.0
  %758 = vmatprep.subr.mxu0 0.0
  %759 = vmatpush1.msra.mxu0 0.0
  %760 = vmatprep.subr.mxu0 0.0
  %761 = vmatpush1.msra.mxu0 0.0
  %762 = vmatprep.subr.mxu0 0.0
  %763 = vmatpush1.msra.mxu0 0.0
  %764 = vmatprep.subr.mxu0 0.0
  %765 = vmatpush1.msra.mxu0 0.0
  %766 = vmatprep.subr.mxu0 0.0
  %767 = vmatpush1.msra.mxu0 0.0
  %768 = vmatprep.subr.mxu0 0.0
  %769 = vmatpush1.msra.mxu0 0.0
  %770 = vmatprep.subr.mxu0 0.0
  %771 = vmatpush1.msra.mxu0 0.0
  %772 = vmatprep.subr.mxu0 0.0
  %773 = vmatpush1.msra.mxu0 0.0
  %774 = vmatprep.subr.mxu0 0.0
  %775 = vmatpush1.msra.mxu0 0.0
  %776 = vmatprep.subr.mxu0 0.0
  %777 = vmatpush1.msra.mxu0 0.0
  %778 = vmatprep.subr.mxu0 0.0
  %779 = vmatpush1.msra.mxu0 0.0
  %780 = vmatprep.subr.mxu0 0.0
  %781 = vmatpush1.msra.mxu0 0.0
  %782 = vmatprep.subr.mxu0 0.0
  %783 = vmatpush1.msra.mxu0 0.0
  %784 = vmatprep.subr.mxu0 0.0
  %785 = vmatpush1.msra.mxu0 0.0
  %786 = vmatprep.subr.mxu0 0.0
  %787 = vmatpush1.msra.mxu0 0.0
  %788 = vmatprep.subr.mxu0 0.0
  %789 = vmatpush1.msra.mxu0 0.0
  %790 = vmatprep.subr.mxu0 0.0
  %791 = vmatpush1.msra.mxu0 0.0
  %792 = vmatprep.subr.mxu0 0.0
  %793 = vmatpush1.msra.mxu0 0.0
  %794 = vmatprep.mubr.f32.mxu0 0.0
  %v795 = vand.u32 %v30, 4294901760
  %v796 = vsub.f32 %v30, %v795
  %v797 = vand.u32 %v796, 4294901760
  %798 = vmatmul.mubr.f32.gmra.mrb[0].mxu0 %v797
  %v799 = vpop.f32.mrb[0].mxu0
  %v800 = vadd.f32 %v725, %v799
  %v801 = vpop.f32.mrb[0].mxu0
  %802 = vdwg.mxu0
  %803 = vmatprep.subr.mxu0 0.0
  %v804 = vand.u32 %v25, 4294901760
  %v805 = vsub.f32 %v25, %v804
  %v806 = vand.u32 %v805, 4294901760
  %807 = vmatpush1.msra.mxu0 %v806
  %808 = vmatprep.subr.mxu0 0.0
  %v809 = vand.u32 %v26, 4294901760
  %v810 = vsub.f32 %v26, %v809
  %v811 = vand.u32 %v810, 4294901760
  %812 = vmatpush1.msra.mxu0 %v811
  %813 = vmatprep.subr.mxu0 0.0
  %814 = vmatpush1.msra.mxu0 0.0
  %815 = vmatprep.subr.mxu0 0.0
  %816 = vmatpush1.msra.mxu0 0.0
  %817 = vmatprep.subr.mxu0 0.0
  %818 = vmatpush1.msra.mxu0 0.0
  %819 = vmatprep.subr.mxu0 0.0
  %820 = vmatpush1.msra.mxu0 0.0
  %821 = vmatprep.subr.mxu0 0.0
  %822 = vmatpush1.msra.mxu0 0.0
  %823 = vmatprep.subr.mxu0 0.0
  %824 = vmatpush1.msra.mxu0 0.0
  %825 = vmatprep.subr.mxu0 0.0
  %826 = vmatpush1.msra.mxu0 0.0
  %827 = vmatprep.subr.mxu0 0.0
  %828 = vmatpush1.msra.mxu0 0.0
  %829 = vmatprep.subr.mxu0 0.0
  %830 = vmatpush1.msra.mxu0 0.0
  %831 = vmatprep.subr.mxu0 0.0
  %832 = vmatpush1.msra.mxu0 0.0
  %833 = vmatprep.subr.mxu0 0.0
  %834 = vmatpush1.msra.mxu0 0.0
  %835 = vmatprep.subr.mxu0 0.0
  %836 = vmatpush1.msra.mxu0 0.0
  %837 = vmatprep.subr.mxu0 0.0
  %838 = vmatpush1.msra.mxu0 0.0
  %839 = vmatprep.subr.mxu0 0.0
  %840 = vmatpush1.msra.mxu0 0.0
  %841 = vmatprep.subr.mxu0 0.0
  %842 = vmatpush1.msra.mxu0 0.0
  %843 = vmatprep.subr.mxu0 0.0
  %844 = vmatpush1.msra.mxu0 0.0
  %845 = vmatprep.subr.mxu0 0.0
  %846 = vmatpush1.msra.mxu0 0.0
  %847 = vmatprep.subr.mxu0 0.0
  %848 = vmatpush1.msra.mxu0 0.0
  %849 = vmatprep.subr.mxu0 0.0
  %850 = vmatpush1.msra.mxu0 0.0
  %851 = vmatprep.subr.mxu0 0.0
  %852 = vmatpush1.msra.mxu0 0.0
  %853 = vmatprep.subr.mxu0 0.0
  %854 = vmatpush1.msra.mxu0 0.0
  %855 = vmatprep.subr.mxu0 0.0
  %856 = vmatpush1.msra.mxu0 0.0
  %857 = vmatprep.subr.mxu0 0.0
  %858 = vmatpush1.msra.mxu0 0.0
  %859 = vmatprep.subr.mxu0 0.0
  %860 = vmatpush1.msra.mxu0 0.0
  %861 = vmatprep.subr.mxu0 0.0
  %862 = vmatpush1.msra.mxu0 0.0
  %863 = vmatprep.subr.mxu0 0.0
  %864 = vmatpush1.msra.mxu0 0.0
  %865 = vmatprep.subr.mxu0 0.0
  %866 = vmatpush1.msra.mxu0 0.0
  %867 = vmatprep.subr.mxu0 0.0
  %868 = vmatpush1.msra.mxu0 0.0
  %869 = vmatprep.subr.mxu0 0.0
  %870 = vmatpush1.msra.mxu0 0.0
  %871 = vmatprep.subr.mxu0 0.0
  %872 = vmatpush1.msra.mxu0 0.0
  %873 = vmatprep.mubr.f32.mxu0 0.0
  %v874 = vand.u32 %v30, 4294901760
  %875 = vmatmul.mubr.f32.gmra.mrb[0].mxu0 %v874
  %v876 = vpop.f32.mrb[0].mxu0
  %v877 = vadd.f32 %v800, %v876
  %v878 = vpop.f32.mrb[0].mxu0
  %879 = vdwg.mxu0
  %880 = vmatprep.subr.mxu0 0.0
  %v881 = vand.u32 %v25, 4294901760
  %882 = vmatpush1.msra.mxu0 %v881
  %883 = vmatprep.subr.mxu0 0.0
  %v884 = vand.u32 %v26, 4294901760
  %885 = vmatpush1.msra.mxu0 %v884
  %886 = vmatprep.subr.mxu0 0.0
  %887 = vmatpush1.msra.mxu0 0.0
  %888 = vmatprep.subr.mxu0 0.0
  %889 = vmatpush1.msra.mxu0 0.0
  %890 = vmatprep.subr.mxu0 0.0
  %891 = vmatpush1.msra.mxu0 0.0
  %892 = vmatprep.subr.mxu0 0.0
  %893 = vmatpush1.msra.mxu0 0.0
  %894 = vmatprep.subr.mxu0 0.0
  %895 = vmatpush1.msra.mxu0 0.0
  %896 = vmatprep.subr.mxu0 0.0
  %897 = vmatpush1.msra.mxu0 0.0
  %898 = vmatprep.subr.mxu0 0.0
  %899 = vmatpush1.msra.mxu0 0.0
  %900 = vmatprep.subr.mxu0 0.0
  %901 = vmatpush1.msra.mxu0 0.0
  %902 = vmatprep.subr.mxu0 0.0
  %903 = vmatpush1.msra.mxu0 0.0
  %904 = vmatprep.subr.mxu0 0.0
  %905 = vmatpush1.msra.mxu0 0.0
  %906 = vmatprep.subr.mxu0 0.0
  %907 = vmatpush1.msra.mxu0 0.0
  %908 = vmatprep.subr.mxu0 0.0
  %909 = vmatpush1.msra.mxu0 0.0
  %910 = vmatprep.subr.mxu0 0.0
  %911 = vmatpush1.msra.mxu0 0.0
  %912 = vmatprep.subr.mxu0 0.0
  %913 = vmatpush1.msra.mxu0 0.0
  %914 = vmatprep.subr.mxu0 0.0
  %915 = vmatpush1.msra.mxu0 0.0
  %916 = vmatprep.subr.mxu0 0.0
  %917 = vmatpush1.msra.mxu0 0.0
  %918 = vmatprep.subr.mxu0 0.0
  %919 = vmatpush1.msra.mxu0 0.0
  %920 = vmatprep.subr.mxu0 0.0
  %921 = vmatpush1.msra.mxu0 0.0
  %922 = vmatprep.subr.mxu0 0.0
  %923 = vmatpush1.msra.mxu0 0.0
  %924 = vmatprep.subr.mxu0 0.0
  %925 = vmatpush1.msra.mxu0 0.0
  %926 = vmatprep.subr.mxu0 0.0
  %927 = vmatpush1.msra.mxu0 0.0
  %928 = vmatprep.subr.mxu0 0.0
  %929 = vmatpush1.msra.mxu0 0.0
  %930 = vmatprep.subr.mxu0 0.0
  %931 = vmatpush1.msra.mxu0 0.0
  %932 = vmatprep.subr.mxu0 0.0
  %933 = vmatpush1.msra.mxu0 0.0
  %934 = vmatprep.subr.mxu0 0.0
  %935 = vmatpush1.msra.mxu0 0.0
  %936 = vmatprep.subr.mxu0 0.0
  %937 = vmatpush1.msra.mxu0 0.0
  %938 = vmatprep.subr.mxu0 0.0
  %939 = vmatpush1.msra.mxu0 0.0
  %940 = vmatprep.subr.mxu0 0.0
  %941 = vmatpush1.msra.mxu0 0.0
  %942 = vmatprep.subr.mxu0 0.0
  %943 = vmatpush1.msra.mxu0 0.0
  %944 = vmatprep.subr.mxu0 0.0
  %945 = vmatpush1.msra.mxu0 0.0
  %946 = vmatprep.mubr.f32.mxu0 0.0
  %v947 = vand.u32 %v30, 4294901760
  %948 = vmatmul.mubr.f32.gmra.mrb[0].mxu0 %v947
  %v949 = vpop.f32.mrb[0].mxu0
  %v950 = vadd.f32 %v877, %v949
  %v951 = vpop.f32.mrb[0].mxu0
  %952 = vdwg.mxu0
  %953 = vst.msk [vmem:[%s6] sm:$0xff] %vm491, %v950
  // Predicated region
  $region22: #{embed_forward.1} parent=0 // pred_check
    _
  $region23: #{embed_forward.1} parent=0 // pred_check_branch
    %955 = sbr.rel (0) target = $region25
  $region24: #{embed_forward.1} parent=0 // pred_region
    _
  $region25: #{embed_forward.1} parent=0 // pred_fallthru
    _
  // Predicated region
  $region26: #{embed_forward.1} parent=0 // pred_check
    _
  $region27: #{embed_forward.1} parent=0 // pred_check_branch
    %957 = sbr.rel (0) target = $region29
  $region28: #{embed_forward.1} parent=0 // pred_region
    _
  $region29: #{embed_forward.1} parent=0 // pred_fallthru
    _
  // Predicated region
  $region30: #{embed_forward.1} parent=0 // pred_check
    _
  $region31: #{embed_forward.1} parent=0 // pred_check_branch
    %959 = sbr.rel (0) target = $region33
  $region32: #{embed_forward.1} parent=0 // pred_region
    _
  $region33: #{embed_forward.1} parent=0 // pred_fallthru
    _
  // Predicated region
  $region34: #{embed_forward.1} parent=0 // pred_check
    _
  $region35: #{embed_forward.1} parent=0 // pred_check_branch
    %961 = sbr.rel (0) target = $region37
  $region36: #{embed_forward.1} parent=0 // pred_region
    _
  $region37: #{embed_forward.1} parent=0 // pred_fallthru
    _

</llo_original>
